<compile_context>
chip_gen: v5e
topology: v5e:2x2
jax: 0.10.0
libtpu: 0.0.40
codegen_flags: <defaults>
</compile_context>

<pallas_src>
import functools

import jax
import jax.numpy as jnp
from jax import lax
from jax.experimental import pallas as pl
from jax.experimental.pallas import tpu as pltpu

_EPS = 1e-5


def _layernorm_kernel(x_ref, g_ref, b_ref, o_ref):
    # x_ref: (row_tile, dim); g_ref/b_ref: (1, dim), already float32.
    x = x_ref[...].astype(jnp.float32)
    mean = jnp.mean(x, axis=-1, keepdims=True)
    centered = x - mean
    var = jnp.mean(centered * centered, axis=-1, keepdims=True)
    y = centered * lax.rsqrt(var + _EPS)
    y = y * g_ref[...] + b_ref[...]
    o_ref[...] = y.astype(o_ref.dtype)


def _round_up(x, m):
    return ((x + m - 1) // m) * m


def _sublane_pack(dtype):
    # Sub-32-bit dtypes pack along sublanes: f32 -> 8, bf16 -> 16, int8/fp8 -> 32.
    return max(8, 32 // jnp.dtype(dtype).itemsize)


def _auto_row_tile(rows, dim, dtype, target_block_bytes=2 << 20, max_rows=1024):
    pack = _sublane_pack(dtype)
    itemsize = jnp.dtype(dtype).itemsize
    tile = target_block_bytes // max(1, dim * itemsize)
    tile = max(pack, (tile // pack) * pack)
    tile = min(tile, max_rows)
    # No point in a block (much) larger than the whole problem.
    tile = min(tile, _round_up(rows, pack))
    return max(pack, tile)


@functools.partial(jax.jit, static_argnames=("row_tile",))
def layer_norm_pallas(features, gamma, beta, *, row_tile=None):
    """LayerNorm over the last axis via a Pallas TPU kernel.

    Intended for lane-dense dims (dim % 128 == 0); use `layer_norm` for the
    general dispatching entry point.
    """
    orig_shape = features.shape
    dim = orig_shape[-1]
    rows = 1
    for s in orig_shape[:-1]:
        rows *= s

    pack = _sublane_pack(features.dtype)
    if row_tile is None:
        row_tile = _auto_row_tile(rows, dim, features.dtype)
    if row_tile <= 0 or row_tile % pack != 0:
        raise ValueError(
            f"row_tile={row_tile} must be a positive multiple of {pack} for "
            f"dtype {features.dtype}")

    x2d = features.reshape(rows, dim)
    # Pre-cast params to f32 once here (not per grid step inside the kernel).
    g2d = gamma.reshape(1, dim).astype(jnp.float32)
    b2d = beta.reshape(1, dim).astype(jnp.float32)

    itemsize = jnp.dtype(features.dtype).itemsize
    block_bytes = row_tile * dim * itemsize
    # Double-buffered input + output blocks, f32 intermediates, params, slack.
    vmem_limit = int(4 * block_bytes + 6 * row_tile * dim * 4
                     + 2 * dim * 4 + (4 << 20))
    vmem_limit = min(max(vmem_limit, 16 << 20), 48 << 20)

    grid = (pl.cdiv(rows, row_tile),)   # ragged tail block handled by Pallas
    out = pl.pallas_call(
        _layernorm_kernel,
        out_shape=jax.ShapeDtypeStruct((rows, dim), features.dtype),
        grid_spec=pltpu.PrefetchScalarGridSpec(
            num_scalar_prefetch=0,
            grid=grid,
            in_specs=[
                pl.BlockSpec((row_tile, dim), lambda i: (i, 0)),
                pl.BlockSpec((1, dim), lambda i: (0, 0)),
                pl.BlockSpec((1, dim), lambda i: (0, 0)),
            ],
            out_specs=pl.BlockSpec((row_tile, dim), lambda i: (i, 0)),
        ),
        compiler_params=pltpu.CompilerParams(
            dimension_semantics=("parallel",),   # sharded across TCs on v7x
            vmem_limit_bytes=vmem_limit,
        ),
        cost_estimate=pl.CostEstimate(
            flops=8 * rows * dim,
            transcendentals=rows,
            bytes_accessed=2 * rows * dim * itemsize + 2 * dim * 4,
        ),
    )(x2d, g2d, b2d)

    return out.reshape(orig_shape)


@jax.jit
def _layer_norm_xla(x, gamma, beta):
    x32 = x.astype(jnp.float32)
    mean = jnp.mean(x32, axis=-1, keepdims=True)
    centered = x32 - mean
    var = jnp.mean(centered * centered, axis=-1, keepdims=True)
    y = centered * lax.rsqrt(var + _EPS)
    y = y * gamma.astype(jnp.float32) + beta.astype(jnp.float32)
    return y.astype(x.dtype)


def layer_norm(features, gamma, beta):
    dim = features.shape[-1]
    if dim >= 128 and dim % 128 == 0:
        return layer_norm_pallas(features, gamma, beta)
    # dim < 128 (or not lane-aligned): every Pallas store would be a masked
    # vst.msk at <= dim/128 lane utilization, so XLA's fused layernorm wins.
    # TODO(synk): lane-pack 128//dim rows per vreg slab with segmented stats
    # if small-dim layernorm ever becomes a hot path.
    return _layer_norm_xla(features, gamma, beta)


class NormLayer:
    """JAX/Pallas port of dreamerv2_torch NormLayer (forward only)."""

    def __init__(self, dim, name, key=None):
        self._name = name
        if name == "none":
            self._gamma = None
            self._beta = None
        elif name == "layer":
            # Deterministic synthetic parameters so the affine part of
            # LayerNorm is actually exercised (torch default init is 1s/0s).
            if key is None:
                key = jax.random.PRNGKey(0)
            kg, kb = jax.random.split(key)
            self._gamma = 1.0 + 0.1 * jax.random.normal(kg, (dim,), jnp.float32)
            self._beta = 0.1 * jax.random.normal(kb, (dim,), jnp.float32)
        else:
            raise NotImplementedError(name)

    def __call__(self, features):
        if self._gamma is None:
            return features
        return layer_norm(features, self._gamma, self._beta)


def _layer_norm_ref(x, gamma, beta):
    x32 = x.astype(jnp.float32)
    mean = jnp.mean(x32, axis=-1, keepdims=True)
    var = jnp.mean((x32 - mean) ** 2, axis=-1, keepdims=True)
    y = (x32 - mean) * lax.rsqrt(var + _EPS)
    return (y * gamma + beta).astype(x.dtype)


if __name__ == "__main__":
    key = jax.random.PRNGKey(0)
    k1, k2, k3, kp = jax.random.split(key, 4)

    hidden = 128
    norm = NormLayer(hidden, "layer", key=kp)

    # 1) Pallas path, lane-dense dim, rows divide the auto row tile evenly.
    x1 = jax.random.normal(k1, (2, 8, hidden), jnp.float32)
    y1 = norm(x1)
    jax.block_until_ready(y1)
    r1 = _layer_norm_ref(x1, norm._gamma, norm._beta)
    assert y1.shape == x1.shape and y1.dtype == x1.dtype
    assert float(jnp.max(jnp.abs(y1 - r1))) < 1e-4

    # 2) Pallas path with a ragged tail row-block (15 rows, row_tile=8):
    #    no wrapper-side padding; out-of-bounds tail rows are clipped on store.
    x2 = jax.random.normal(k2, (3, 5, hidden), jnp.float32)
    y2 = layer_norm_pallas(x2, norm._gamma, norm._beta, row_tile=8)
    jax.block_until_ready(y2)
    r2 = _layer_norm_ref(x2, norm._gamma, norm._beta)
    assert float(jnp.max(jnp.abs(y2 - r2))) < 1e-4

    # 3) bf16 input: auto row_tile rounds to a multiple of 16 (sublane packing).
    x3 = jax.random.normal(k3, (2, 8, hidden), jnp.float32).astype(jnp.bfloat16)
    y3 = norm(x3)
    jax.block_until_ready(y3)
    r3 = _layer_norm_ref(x3, norm._gamma, norm._beta)
    assert y3.dtype == jnp.bfloat16
    assert float(jnp.max(jnp.abs(y3.astype(jnp.float32)
                                 - r3.astype(jnp.float32)))) < 5e-2

    # 4) Small dim (32 < 128): dispatcher falls back to the XLA path.
    small = NormLayer(32, "layer", key=kp)
    x4 = jax.random.normal(k1, (2, 8, 32), jnp.float32)
    y4 = small(x4)
    jax.block_until_ready(y4)
    assert float(jnp.max(jnp.abs(
        y4 - _layer_norm_ref(x4, small._gamma, small._beta)))) < 1e-4

    # 5) name='none' identity path.
    ident = NormLayer(hidden, "none")
    y5 = ident(x1)
    jax.block_until_ready(y5)
    assert jnp.array_equal(y5, x1)

    print("KERNEL_OK")
</pallas_src>

<mosaic_0001>
module attributes {stable_mosaic.version = 11 : i64} {
  func.func @_layernorm_kernel(%arg0: i32, %arg1: memref<16x128xf32, #tpu.memory_space<vmem>>, %arg2: memref<1x128xf32, #tpu.memory_space<vmem>>, %arg3: memref<1x128xf32, #tpu.memory_space<vmem>>, %arg4: memref<16x128xf32, #tpu.memory_space<vmem>>) attributes {dimension_semantics = [#tpu.dimension_semantics<parallel>], iteration_bounds = array<i64: 1>, scalar_prefetch = 0 : i64, scratch_operands = 0 : i64, tpu.core_type = #tpu.core_type<tc>, window_params = [{transform_indices = @transform_0, window_bounds = array<i64: 16, 128>}, {pipeline_mode = #tpu.pipeline_mode<synchronous>, transform_indices = @transform_1, window_bounds = array<i64: 1, 128>}, {pipeline_mode = #tpu.pipeline_mode<synchronous>, transform_indices = @transform_2, window_bounds = array<i64: 1, 128>}, {transform_indices = @transform_3, window_bounds = array<i64: 16, 128>}]} {
    %c0 = arith.constant 0 : index
    %c0_0 = arith.constant 0 : index
    %0 = vector.load %arg1[%c0, %c0_0] : memref<16x128xf32, #tpu.memory_space<vmem>>, vector<16x128xf32>
    %cst = arith.constant dense<0.000000e+00> : vector<16xf32>
    %1 = vector.multi_reduction <add>, %0, %cst [1] : vector<16x128xf32> to vector<16xf32>
    %2 = vector.shape_cast %1 : vector<16xf32> to vector<16x1xf32>
    %cst_1 = arith.constant 1.280000e+02 : f32
    %3 = vector.broadcast %cst_1 : f32 to vector<16x1xf32>
    %4 = arith.divf %2, %3 : vector<16x1xf32>
    %5 = vector.broadcast %4 : vector<16x1xf32> to vector<16x128xf32>
    %6 = arith.subf %0, %5 : vector<16x128xf32>
    %7 = arith.mulf %6, %6 : vector<16x128xf32>
    %cst_2 = arith.constant dense<0.000000e+00> : vector<16xf32>
    %8 = vector.multi_reduction <add>, %7, %cst_2 [1] : vector<16x128xf32> to vector<16xf32>
    %9 = vector.shape_cast %8 : vector<16xf32> to vector<16x1xf32>
    %cst_3 = arith.constant 1.280000e+02 : f32
    %10 = vector.broadcast %cst_3 : f32 to vector<16x1xf32>
    %11 = arith.divf %9, %10 : vector<16x1xf32>
    %cst_4 = arith.constant 9.99999974E-6 : f32
    %12 = vector.broadcast %cst_4 : f32 to vector<16x1xf32>
    %13 = arith.addf %11, %12 : vector<16x1xf32>
    %14 = math.rsqrt %13 : vector<16x1xf32>
    %15 = vector.broadcast %14 : vector<16x1xf32> to vector<16x128xf32>
    %16 = arith.mulf %6, %15 : vector<16x128xf32>
    %c0_5 = arith.constant 0 : index
    %c0_6 = arith.constant 0 : index
    %17 = vector.load %arg2[%c0_5, %c0_6] : memref<1x128xf32, #tpu.memory_space<vmem>>, vector<1x128xf32>
    %18 = vector.broadcast %17 : vector<1x128xf32> to vector<16x128xf32>
    %19 = arith.mulf %16, %18 : vector<16x128xf32>
    %c0_7 = arith.constant 0 : index
    %c0_8 = arith.constant 0 : index
    %20 = vector.load %arg3[%c0_7, %c0_8] : memref<1x128xf32, #tpu.memory_space<vmem>>, vector<1x128xf32>
    %21 = vector.broadcast %20 : vector<1x128xf32> to vector<16x128xf32>
    %22 = arith.addf %19, %21 : vector<16x128xf32>
    %c0_9 = arith.constant 0 : index
    %c0_10 = arith.constant 0 : index
    %23 = vector.load %arg4[%c0_9, %c0_10] : memref<16x128xf32, #tpu.memory_space<vmem>>, vector<16x128xf32>
    tpu.vector_store %arg4[%c0_9, %c0_10], %22 {strides = array<i32>} : memref<16x128xf32, #tpu.memory_space<vmem>>, vector<16x128xf32>,
    return
  }
  func.func @transform_0(%arg0: i32) -> (i32, i32) {
    %c0_i32 = arith.constant 0 : i32
    %c0_i32_0 = arith.constant 0 : i32
    return %arg0, %c0_i32 : i32, i32
  }
  func.func @transform_1(%arg0: i32) -> (i32, i32) {
    %c0_i32 = arith.constant 0 : i32
    %c0_i32_0 = arith.constant 0 : i32
    %c0_i32_1 = arith.constant 0 : i32
    return %c0_i32, %c0_i32_0 : i32, i32
  }
  func.func @transform_2(%arg0: i32) -> (i32, i32) {
    %c0_i32 = arith.constant 0 : i32
    %c0_i32_0 = arith.constant 0 : i32
    %c0_i32_1 = arith.constant 0 : i32
    return %c0_i32, %c0_i32_0 : i32, i32
  }
  func.func @transform_3(%arg0: i32) -> (i32, i32) {
    %c0_i32 = arith.constant 0 : i32
    %c0_i32_0 = arith.constant 0 : i32
    return %arg0, %c0_i32 : i32, i32
  }
}

</mosaic_0001>

<llo_original>
// kernel: layer_norm_pallas.1
$region0: #{layer_norm_pallas.1}
  #allocation0 [shape = 'u32[]', space=smem, size = 0x4, offset = 0x4, fixed_abs, tag = 'smem constant byte address 0x4 - core index']
  #allocation1 [shape = 'u32[72,128]{1,0:T(1,128)}', space=vmem, size = 0x9000, scoped, tag = 'internal scratch']
  %s0 = inlined_call_operand.hbm [shape: f32[16,128], index: 0, kind: input, shape index: {}]
  %s1 = inlined_call_operand.vmem [shape: f32[1,128], index: 1, kind: input, shape index: {}]
  %s2 = inlined_call_operand.vmem [shape: f32[1,128], index: 2, kind: input, shape index: {}]
  %s3 = inlined_call_operand.hbm [shape: f32[16,128], index: 3, kind: output, shape index: {}]
  %s4 = sld [smem:[#allocation0]]
  $region26: #{layer_norm_pallas.1} parent=0
    _
  %s6 = ssub.s32 1, %s4
  %s7 = scalar_select 0, %s6, %s4
  $region1: #{layer_norm_pallas.1} parent=0
    #allocation2 [shape = 'u8[8192]{0}', space=vmem, size = 0x2000, scoped, tag = 'input window, operand 0, single buffered']
    #allocation3 [shape = 's32[1]{0}', space=sflag, size = 0x4, scoped, tag = 'scoped memory for layer_norm_pallas.1']
    #allocation4 [shape = 's32[1]{0}', space=sflag, size = 0x4, scoped, tag = 'scoped memory for layer_norm_pallas.1']
    #allocation5 [shape = 'u8[8192]{0}', space=vmem, size = 0x2000, scoped, tag = 'output window, operand 0, single buffered']
    %8 = vsyncpa [#allocation3], 0
    %9 = vsyncpa [#allocation4], 0
    // Predicated region
    $region2: #{layer_norm_pallas.1} parent=1 // pred_check
      _
    $region3: #{layer_norm_pallas.1} parent=1 // pred_check_branch
      %11 = sbr.rel (0) target = $region5
    $region4: #{layer_norm_pallas.1} parent=1 // pred_region
      %13 = vsyncadd [#allocation3], 0
      %s14 = sshll.u32 %s0, 4
      %s15 = int_to_ptr.hbm [resolvable:$true] %s14
      %s16 = sshll.u32 [#allocation2], 4
      %s17 = int_to_ptr.vmem [resolvable:$true] %s16
      %22 = dma.hbm_to_vmem [thread:$0]  %s15, 256, %s17, [#allocation3], 128, 128, 8
    $region5: #{layer_norm_pallas.1} parent=1 // pred_fallthru
      _
    // Predicated region
    $region6: #{layer_norm_pallas.1} parent=1 // pred_check
      _
    $region7: #{layer_norm_pallas.1} parent=1 // pred_check_branch
      %24 = sbr.rel (0) target = $region9
    $region8: #{layer_norm_pallas.1} parent=1 // pred_region
      _
    $region9: #{layer_norm_pallas.1} parent=1 // pred_fallthru
      _
    // Predicated region
    $region10: #{layer_norm_pallas.1} parent=1 // pred_check
      _
    $region11: #{layer_norm_pallas.1} parent=1 // pred_check_branch
      %26 = sbr.rel (0) target = $region13
    $region12: #{layer_norm_pallas.1} parent=1 // pred_region
      _
    $region13: #{layer_norm_pallas.1} parent=1 // pred_fallthru
      _
    // Predicated region
    $region14: #{layer_norm_pallas.1} parent=1 // pred_check
      _
    $region15: #{layer_norm_pallas.1} parent=1 // pred_check_branch
      %28 = sbr.rel (0) target = $region17
    $region16: #{layer_norm_pallas.1} parent=1 // pred_region
      %30 = dma.done [#allocation3], 256
    $region17: #{layer_norm_pallas.1} parent=1 // pred_fallthru
      _
    %v31 = vld [vmem:[#allocation2] sm:$0xff]
    %v32 = vld [vmem:[#allocation2 + $0x8] sm:$0xff]
    %33 = vadd.xlane.f32.xlu0 %v31
    %v34 = vpop.xlane.xlu0 %33
    %35 = vadd.xlane.f32.xlu0 %v32
    %v36 = vpop.xlane.xlu0 %35
    %v37 = vrcp.pop 128.0
    %v38 = vmul.f32 128.0, %v37
    %v39 = vsub.f32 1.0, %v38
    %v40 = vmul.f32 %v37, %v39
    %v41 = vadd.f32 %v37, %v40
    %vm42 = vweird.f32 %v37
    %v43 = vsel %vm42, %v37, %v41
    %v44 = vmul.f32 %v34, %v43
    %v45 = vmul.f32 %v36, %v43
    %v46 = vsub.f32 %v31, %v44
    %v47 = vsub.f32 %v32, %v45
    %v48 = vmul.f32 %v46, %v46
    %v49 = vmul.f32 %v47, %v47
    %50 = vadd.xlane.f32.xlu0 %v48
    %v51 = vpop.xlane.xlu0 %50
    %52 = vadd.xlane.f32.xlu0 %v49
    %v53 = vpop.xlane.xlu0 %52
    %v54 = vmul.f32 %v51, %v43
    %v55 = vmul.f32 %v53, %v43
    %v56 = vadd.f32 %v54, 1e-05
    %v57 = vadd.f32 %v55, 1e-05
    %v58 = vrsqrt.pop %v56
    %v59 = vmul.f32 %v58, %v56
    %v60 = vmul.f32 %v59, %v58
    %v61 = vmul.f32 0.5, %v60
    %v62 = vsub.f32 1.5, %v61
    %v63 = vmul.f32 %v58, %v62
    %vm64 = vweird.f32 %v56
    %vm65 = vweird.f32 %v58
    %vm66 = vmor %vm64, %vm65
    %v67 = vsel %vm66, %v58, %v63
    %v68 = vrsqrt.pop %v57
    %v69 = vmul.f32 %v68, %v57
    %v70 = vmul.f32 %v69, %v68
    %v71 = vmul.f32 0.5, %v70
    %v72 = vsub.f32 1.5, %v71
    %v73 = vmul.f32 %v68, %v72
    %vm74 = vweird.f32 %v57
    %vm75 = vweird.f32 %v68
    %vm76 = vmor %vm74, %vm75
    %v77 = vsel %vm76, %v68, %v73
    %v78 = vmul.f32 %v46, %v67
    %v79 = vmul.f32 %v47, %v77
    %v80 = vld [vmem:[%s1] sm:$0x1]
    %v82 = vperm.slane %v80, 0
    %v84 = vmul.f32 %v78, %v82
    %v85 = vmul.f32 %v79, %v82
    %v86 = vld [vmem:[%s2] sm:$0x1]
    %v88 = vperm.slane %v86, 0
    %v90 = vadd.f32 %v84, %v88
    %v91 = vadd.f32 %v85, %v88
    %92 = vst [vmem:[#allocation5] sm:$0xff] %v90
    %93 = vst [vmem:[#allocation5 + $0x8] sm:$0xff] %v91
    // Predicated region
    $region18: #{layer_norm_pallas.1} parent=1 // pred_check
      _
    $region19: #{layer_norm_pallas.1} parent=1 // pred_check_branch
      %95 = sbr.rel (0) target = $region21
    $region20: #{layer_norm_pallas.1} parent=1 // pred_region
      %97 = vsyncadd [#allocation4], 0
      %s98 = sshll.u32 [#allocation5], 4
      %s99 = int_to_ptr.vmem [resolvable:$true] %s98
      %s100 = sshll.u32 %s3, 4
      %s101 = int_to_ptr.hbm [resolvable:$true] %s100
      %106 = dma.vmem_to_hbm [thread:$0]  %s99, 256, %s101, [#allocation4], 128, 128, 8
    $region21: #{layer_norm_pallas.1} parent=1 // pred_fallthru
      _
    // Predicated region
    $region22: #{layer_norm_pallas.1} parent=1 // pred_check
      _
    $region23: #{layer_norm_pallas.1} parent=1 // pred_check_branch
      %108 = sbr.rel (0) target = $region25
    $region24: #{layer_norm_pallas.1} parent=1 // pred_region
      %110 = dma.done [#allocation4], 256
    $region25: #{layer_norm_pallas.1} parent=1 // pred_fallthru
      _
    %111 = vsyncpa [#allocation3], 1
    %112 = vsyncpa [#allocation4], 1

</llo_original>
